<compile_context>
chip_gen: v7x
topology: tpu7x:2x2x1
jax: 0.10.0
libtpu: 0.0.40
codegen_flags: <defaults>
</compile_context>

<pallas_src>
import functools

import jax
import jax.numpy as jnp
from jax.experimental import pallas as pl
from jax.experimental.pallas import tpu as pltpu


def _multihead_kernel(x_ref, w_ref, b_ref, out_ref, *, num_heads, action_dim):
    # x_ref:   (Bpad, D)       full block, VMEM resident
    # w_ref:   (D, Npad)       all heads' weights, lane-concatenated + zero-padded
    # b_ref:   (1, Npad)       all heads' biases, lane-concatenated + zero-padded
    # out_ref: (Bpad, Npad)    lane-dense normalized-logits slab
    x = x_ref[...]                                      # (Bpad, D)
    w = w_ref[...]                                      # (D, Npad)

    # Single wide MXU matmul for every head at once, f32 accumulation.
    logits = jnp.dot(x, w, preferred_element_type=jnp.float32) + b_ref[...]

    # Per-head Categorical logits normalization: logits - logsumexp(logits, -1).
    # H is small and static, so a static Python loop over heads (static lane
    # slices) keeps everything on the VPU/EUP with no dynamic indexing.
    parts = []
    for h in range(num_heads):
        lh = logits[:, h * action_dim:(h + 1) * action_dim]       # (Bpad, A)
        m = jnp.max(lh, axis=-1, keepdims=True)
        lse = m + jnp.log(jnp.sum(jnp.exp(lh - m), axis=-1, keepdims=True))
        parts.append(lh - lse)

    n_used = num_heads * action_dim
    n_pad = out_ref.shape[-1] - n_used
    if n_pad > 0:
        parts.append(jnp.zeros((logits.shape[0], n_pad), dtype=logits.dtype))

    # One full-lane-width store of the whole slab.
    out_ref[...] = jnp.concatenate(parts, axis=-1).astype(out_ref.dtype)


def _round_up(x, m):
    return ((x + m - 1) // m) * m


def multihead_categorical_forward(x, W, b):
    """x: (B, D) f32; W: (H, D, A) f32; b: (H, A) f32 -> (H, B, A) normalized logits."""
    H, D, A = W.shape
    B = x.shape[0]

    n_used = H * A
    n_pad = _round_up(n_used, 128)      # lane-dense output slab width
    b_pad = _round_up(B, 8)             # f32 sublane multiple

    # Host-side layout plumbing (handled by XLA, not kernel compute):
    #   W (H, D, A) -> (D, H*A) lane-concatenated, zero-padded to (D, Npad).
    w_flat = jnp.transpose(W, (1, 0, 2)).reshape(D, n_used)
    w_flat = jnp.pad(w_flat, ((0, 0), (0, n_pad - n_used)))
    b_flat = jnp.pad(b.reshape(1, n_used), ((0, 0), (0, n_pad - n_used)))
    x_pad = jnp.pad(x, ((0, b_pad - B), (0, 0))) if b_pad != B else x

    kernel = functools.partial(_multihead_kernel, num_heads=H, action_dim=A)

    out_slab = pl.pallas_call(
        kernel,
        out_shape=jax.ShapeDtypeStruct((b_pad, n_pad), jnp.float32),
        in_specs=[
            pl.BlockSpec(memory_space=pltpu.MemorySpace.VMEM),   # x  (whole array)
            pl.BlockSpec(memory_space=pltpu.MemorySpace.VMEM),   # W  (whole array, ~6 KB)
            pl.BlockSpec(memory_space=pltpu.MemorySpace.VMEM),   # b
        ],
        out_specs=pl.BlockSpec(memory_space=pltpu.MemorySpace.VMEM),
    )(x_pad, w_flat, b_flat)

    # Recover (H, B, A) view: slice off batch / lane padding, split heads.
    out = out_slab[:B, :n_used].reshape(B, H, A)
    return jnp.transpose(out, (1, 0, 2))


def orthogonal_init(key, shape, gain=0.01, dtype=jnp.float32):
    """Deterministic orthogonal init matching nn.init.orthogonal_ semantics."""
    rows, cols = shape
    n = max(rows, cols)
    a = jax.random.normal(key, (n, n), dtype=jnp.float32)
    q, r = jnp.linalg.qr(a)
    q = q * jnp.sign(jnp.diag(r))[None, :]
    return (gain * q[:rows, :cols]).astype(dtype)


if __name__ == "__main__":
    # Small, module-consistent shapes.
    batch = 8
    num_inputs = 32      # input feature dim
    action_num = 3       # number of heads (linear layers)
    action_dim = 16      # per-head categorical dim

    key = jax.random.PRNGKey(0)
    k_x, k_w = jax.random.split(key)

    # Parameters: each head is nn.Linear(num_inputs, action_dim) with
    # orthogonal weights (gain=0.01) and zero bias, stacked across heads.
    w_keys = jax.random.split(k_w, action_num)
    # PyTorch Linear weight is (out, in); we store transposed (in, out) for x @ W.
    W = jnp.stack(
        [orthogonal_init(w_keys[h], (action_dim, num_inputs)).T for h in range(action_num)],
        axis=0,
    )  # (action_num, num_inputs, action_dim)
    b = jnp.zeros((action_num, action_dim), dtype=jnp.float32)

    x = jax.random.normal(k_x, (batch, num_inputs), dtype=jnp.float32)

    out = multihead_categorical_forward(x, W, b)
    jax.block_until_ready(out)

    # Reference check in plain JAX (matmul + Categorical logits normalization).
    ref_logits = jnp.einsum("bd,hda->hba", x, W) + b[:, None, :]
    ref = ref_logits - jax.scipy.special.logsumexp(ref_logits, axis=-1, keepdims=True)
    assert out.shape == (action_num, batch, action_dim)
    assert jnp.allclose(out, ref, atol=1e-5, rtol=1e-5)

    print("KERNEL_OK")
</pallas_src>

<mosaic_0001>
module attributes {stable_mosaic.version = 11 : i64} {
  func.func @_multihead_kernel(%arg0: memref<8x32xf32, #tpu.memory_space<vmem>>, %arg1: memref<32x128xf32, #tpu.memory_space<vmem>>, %arg2: memref<1x128xf32, #tpu.memory_space<vmem>>, %arg3: memref<8x128xf32, #tpu.memory_space<vmem>>) attributes {dimension_semantics = [], scalar_prefetch = 0 : i64, scratch_operands = 0 : i64, tpu.core_type = #tpu.core_type<tc>} {
    %c0 = arith.constant 0 : index
    %c0_0 = arith.constant 0 : index
    %0 = vector.load %arg0[%c0, %c0_0] : memref<8x32xf32, #tpu.memory_space<vmem>>, vector<8x32xf32>
    %c0_1 = arith.constant 0 : index
    %c0_2 = arith.constant 0 : index
    %1 = vector.load %arg1[%c0_1, %c0_2] : memref<32x128xf32, #tpu.memory_space<vmem>>, vector<32x128xf32>
    %cst = arith.constant dense<0.000000e+00> : vector<8x128xf32>
    %2 = tpu.matmul %0, %1, %cst {dimension_numbers = #tpu.dot_dimension_numbers<[1], [0], [0], [1], [0, 0, 1, 1], [], []>} : vector<8x32xf32>, vector<32x128xf32>, vector<8x128xf32> -> vector<8x128xf32>
    %c0_3 = arith.constant 0 : index
    %c0_4 = arith.constant 0 : index
    %3 = vector.load %arg2[%c0_3, %c0_4] : memref<1x128xf32, #tpu.memory_space<vmem>>, vector<1x128xf32>
    %4 = vector.broadcast %3 : vector<1x128xf32> to vector<8x128xf32>
    %5 = arith.addf %2, %4 : vector<8x128xf32>
    %6 = vector.extract_strided_slice %5 {offsets = [0, 0], sizes = [8, 16], strides = [1, 1]} : vector<8x128xf32> to vector<8x16xf32>
    %cst_5 = arith.constant dense<0xFF800000> : vector<8xf32>
    %7 = vector.multi_reduction <maximumf>, %6, %cst_5 [1] : vector<8x16xf32> to vector<8xf32>
    %8 = vector.shape_cast %7 : vector<8xf32> to vector<8x1xf32>
    %9 = vector.broadcast %8 : vector<8x1xf32> to vector<8x16xf32>
    %10 = arith.subf %6, %9 : vector<8x16xf32>
    %11 = math.exp %10 : vector<8x16xf32>
    %cst_6 = arith.constant dense<0.000000e+00> : vector<8xf32>
    %12 = vector.multi_reduction <add>, %11, %cst_6 [1] : vector<8x16xf32> to vector<8xf32>
    %13 = vector.shape_cast %12 : vector<8xf32> to vector<8x1xf32>
    %14 = math.log %13 : vector<8x1xf32>
    %15 = arith.addf %8, %14 : vector<8x1xf32>
    %16 = vector.broadcast %15 : vector<8x1xf32> to vector<8x16xf32>
    %17 = arith.subf %6, %16 : vector<8x16xf32>
    %18 = vector.extract_strided_slice %5 {offsets = [0, 16], sizes = [8, 16], strides = [1, 1]} : vector<8x128xf32> to vector<8x16xf32>
    %cst_7 = arith.constant dense<0xFF800000> : vector<8xf32>
    %19 = vector.multi_reduction <maximumf>, %18, %cst_7 [1] : vector<8x16xf32> to vector<8xf32>
    %20 = vector.shape_cast %19 : vector<8xf32> to vector<8x1xf32>
    %21 = vector.broadcast %20 : vector<8x1xf32> to vector<8x16xf32>
    %22 = arith.subf %18, %21 : vector<8x16xf32>
    %23 = math.exp %22 : vector<8x16xf32>
    %cst_8 = arith.constant dense<0.000000e+00> : vector<8xf32>
    %24 = vector.multi_reduction <add>, %23, %cst_8 [1] : vector<8x16xf32> to vector<8xf32>
    %25 = vector.shape_cast %24 : vector<8xf32> to vector<8x1xf32>
    %26 = math.log %25 : vector<8x1xf32>
    %27 = arith.addf %20, %26 : vector<8x1xf32>
    %28 = vector.broadcast %27 : vector<8x1xf32> to vector<8x16xf32>
    %29 = arith.subf %18, %28 : vector<8x16xf32>
    %30 = vector.extract_strided_slice %5 {offsets = [0, 32], sizes = [8, 16], strides = [1, 1]} : vector<8x128xf32> to vector<8x16xf32>
    %cst_9 = arith.constant dense<0xFF800000> : vector<8xf32>
    %31 = vector.multi_reduction <maximumf>, %30, %cst_9 [1] : vector<8x16xf32> to vector<8xf32>
    %32 = vector.shape_cast %31 : vector<8xf32> to vector<8x1xf32>
    %33 = vector.broadcast %32 : vector<8x1xf32> to vector<8x16xf32>
    %34 = arith.subf %30, %33 : vector<8x16xf32>
    %35 = math.exp %34 : vector<8x16xf32>
    %cst_10 = arith.constant dense<0.000000e+00> : vector<8xf32>
    %36 = vector.multi_reduction <add>, %35, %cst_10 [1] : vector<8x16xf32> to vector<8xf32>
    %37 = vector.shape_cast %36 : vector<8xf32> to vector<8x1xf32>
    %38 = math.log %37 : vector<8x1xf32>
    %39 = arith.addf %32, %38 : vector<8x1xf32>
    %40 = vector.broadcast %39 : vector<8x1xf32> to vector<8x16xf32>
    %41 = arith.subf %30, %40 : vector<8x16xf32>
    %cst_11 = arith.constant 0.000000e+00 : f32
    %42 = vector.broadcast %cst_11 : f32 to vector<8x80xf32>
    %43 = tpu.concatenate %17, %29, %41, %42 in 1 : vector<8x16xf32>, vector<8x16xf32>, vector<8x16xf32>, vector<8x80xf32> -> vector<8x128xf32>
    %c0_12 = arith.constant 0 : index
    %c0_13 = arith.constant 0 : index
    %44 = vector.load %arg3[%c0_12, %c0_13] : memref<8x128xf32, #tpu.memory_space<vmem>>, vector<8x128xf32>
    tpu.vector_store %arg3[%c0_12, %c0_13], %43 {strides = array<i32>} : memref<8x128xf32, #tpu.memory_space<vmem>>, vector<8x128xf32>,
    return
  }
}

</mosaic_0001>

<llo_original>
// kernel: tpu_custom_call.1
$region0: #{tpu_custom_call.1}
  #allocation0 [shape = 'u32[]', space=smem, size = 0x4, offset = 0x4, fixed_abs, tag = 'smem constant byte address 0x4 - core index']
  #allocation1 [shape = 'u32[144,128]{1,0:T(1,128)}', space=vmem, size = 0x12000, scoped, tag = 'internal scratch']
  %s0 = inlined_call_operand.hbm [shape: f32[8,32], index: 0, kind: input, shape index: {}]
  %s1 = inlined_call_operand.hbm [shape: f32[32,128], index: 1, kind: input, shape index: {}]
  %s2 = inlined_call_operand.vmem [shape: f32[1,128], index: 2, kind: input, shape index: {}]
  %s3 = inlined_call_operand.hbm [shape: f32[8,128], index: 3, kind: output, shape index: {}]
  %s4 = sld [smem:[#allocation0]]
  $region30: #{tpu_custom_call.1} parent=0
    _
  %s6 = ssub.s32 1, %s4
  %s7 = scalar_select 0, %s6, %s4
  $region1: #{tpu_custom_call.1} parent=0
    #allocation2 [shape = 'u8[4096]{0}', space=vmem, size = 0x1000, scoped, tag = 'input window, operand 0, single buffered']
    #allocation3 [shape = 's32[1]{0}', space=sflag, size = 0x4, scoped, tag = 'scoped memory for tpu_custom_call.1']
    #allocation4 [shape = 's32[1]{0}', space=sflag, size = 0x4, scoped, tag = 'scoped memory for tpu_custom_call.1']
    #allocation5 [shape = 'u8[16384]{0}', space=vmem, size = 0x4000, scoped, tag = 'input window, operand 1, single buffered']
    #allocation6 [shape = 's32[1]{0}', space=sflag, size = 0x4, scoped, tag = 'scoped memory for tpu_custom_call.1']
    #allocation7 [shape = 'u8[4096]{0}', space=vmem, size = 0x1000, scoped, tag = 'output window, operand 0, single buffered']
    %8 = vsyncpa [#allocation3], 0
    %9 = vsyncpa [#allocation6], 0
    %10 = vsyncpa [#allocation4], 0
    // Predicated region
    $region2: #{tpu_custom_call.1} parent=1 // pred_check
      _
    $region3: #{tpu_custom_call.1} parent=1 // pred_check_branch
      %12 = sbr.rel (0) target = $region5
    $region4: #{tpu_custom_call.1} parent=1 // pred_region
      %s14 = ssub.s32 128, 128
      %15 = vsyncadd [#allocation3], %s14
      %s17 = sshll.u32 [#allocation2], 4
      %s18 = int_to_ptr.vmem [resolvable:$true] %s17
      %20 = dma.hbm_to_vmem [thread:$0]  %s0, 128, %s18, [#allocation3]
    $region5: #{tpu_custom_call.1} parent=1 // pred_fallthru
      _
    // Predicated region
    $region6: #{tpu_custom_call.1} parent=1 // pred_check
      _
    $region7: #{tpu_custom_call.1} parent=1 // pred_check_branch
      %22 = sbr.rel (0) target = $region9
    $region8: #{tpu_custom_call.1} parent=1 // pred_region
      %s24 = ssub.s32 512, 512
      %25 = vsyncadd [#allocation6], %s24
      %s26 = sshll.u32 [#allocation5], 4
      %s27 = int_to_ptr.vmem [resolvable:$true] %s26
      %32 = dma.hbm_to_vmem [thread:$0]  %s1, 512, %s27, [#allocation6], 128, 128, 8
    $region9: #{tpu_custom_call.1} parent=1 // pred_fallthru
      _
    // Predicated region
    $region10: #{tpu_custom_call.1} parent=1 // pred_check
      _
    $region11: #{tpu_custom_call.1} parent=1 // pred_check_branch
      %34 = sbr.rel (0) target = $region13
    $region12: #{tpu_custom_call.1} parent=1 // pred_region
      _
    $region13: #{tpu_custom_call.1} parent=1 // pred_fallthru
      _
    // Predicated region
    $region14: #{tpu_custom_call.1} parent=1 // pred_check
      _
    $region15: #{tpu_custom_call.1} parent=1 // pred_check_branch
      %36 = sbr.rel (0) target = $region17
    $region16: #{tpu_custom_call.1} parent=1 // pred_region
      %37 = dma.done [#allocation3], 128
    $region17: #{tpu_custom_call.1} parent=1 // pred_fallthru
      _
    // Predicated region
    $region18: #{tpu_custom_call.1} parent=1 // pred_check
      _
    $region19: #{tpu_custom_call.1} parent=1 // pred_check_branch
      %39 = sbr.rel (0) target = $region21
    $region20: #{tpu_custom_call.1} parent=1 // pred_region
      %40 = dma.done [#allocation6], 512
    $region21: #{tpu_custom_call.1} parent=1 // pred_fallthru
      _
    %v41 = vld [vmem:[#allocation2] sm:$0xff]
    %v42 = vld [vmem:[#allocation5] sm:$0xff]
    %v43 = vld [vmem:[#allocation5 + $0x8] sm:$0xff]
    %v44 = vld [vmem:[#allocation5 + $0x10] sm:$0xff]
    %v45 = vld [vmem:[#allocation5 + $0x18] sm:$0xff]
    %v46 = vld [vmem:[%s2] sm:$0x1]
    %v48 = vlaneseq
    %v49 = vshrl.u32 %v48, 7
    %v50 = vsub.s32 0, %v49
    %v51 = vrot.slane %v46, %v50
    %vm53 = vcmask 261120
    %v55 = vsel %vm53, %v41, 0
    %57 = vmatprep.subr.mxu0 0.0
    %58 = vmatpush1.msra.mxu0 %v42
    %59 = vmatprep.subr.mxu0 0.0
    %60 = vmatpush1.msra.mxu0 %v43
    %61 = vmatprep.subr.mxu0 0.0
    %62 = vmatpush1.msra.mxu0 %v44
    %63 = vmatprep.subr.mxu0 0.0
    %64 = vmatpush1.msra.mxu0 %v45
    %65 = vmatprep.subr.mxu0 0.0
    %66 = vmatpush1.msra.mxu0 0.0
    %67 = vmatprep.subr.mxu0 0.0
    %68 = vmatpush1.msra.mxu0 0.0
    %69 = vmatprep.subr.mxu0 0.0
    %70 = vmatpush1.msra.mxu0 0.0
    %71 = vmatprep.subr.mxu0 0.0
    %72 = vmatpush1.msra.mxu0 0.0
    %73 = vmatprep.subr.mxu0 0.0
    %74 = vmatpush1.msra.mxu0 0.0
    %75 = vmatprep.subr.mxu0 0.0
    %76 = vmatpush1.msra.mxu0 0.0
    %77 = vmatprep.subr.mxu0 0.0
    %78 = vmatpush1.msra.mxu0 0.0
    %79 = vmatprep.subr.mxu0 0.0
    %80 = vmatpush1.msra.mxu0 0.0
    %81 = vmatprep.subr.mxu0 0.0
    %82 = vmatpush1.msra.mxu0 0.0
    %83 = vmatprep.subr.mxu0 0.0
    %84 = vmatpush1.msra.mxu0 0.0
    %85 = vmatprep.subr.mxu0 0.0
    %86 = vmatpush1.msra.mxu0 0.0
    %87 = vmatprep.subr.mxu0 0.0
    %88 = vmatpush1.msra.mxu0 0.0
    %89 = vmatprep.subr.mxu0 0.0
    %90 = vmatpush1.msra.mxu0 0.0
    %91 = vmatprep.subr.mxu0 0.0
    %92 = vmatpush1.msra.mxu0 0.0
    %93 = vmatprep.subr.mxu0 0.0
    %94 = vmatpush1.msra.mxu0 0.0
    %95 = vmatprep.subr.mxu0 0.0
    %96 = vmatpush1.msra.mxu0 0.0
    %97 = vmatprep.subr.mxu0 0.0
    %98 = vmatpush1.msra.mxu0 0.0
    %99 = vmatprep.subr.mxu0 0.0
    %100 = vmatpush1.msra.mxu0 0.0
    %101 = vmatprep.subr.mxu0 0.0
    %102 = vmatpush1.msra.mxu0 0.0
    %103 = vmatprep.subr.mxu0 0.0
    %104 = vmatpush1.msra.mxu0 0.0
    %105 = vmatprep.subr.mxu0 0.0
    %106 = vmatpush1.msra.mxu0 0.0
    %107 = vmatprep.subr.mxu0 0.0
    %108 = vmatpush1.msra.mxu0 0.0
    %109 = vmatprep.subr.mxu0 0.0
    %110 = vmatpush1.msra.mxu0 0.0
    %111 = vmatprep.subr.mxu0 0.0
    %112 = vmatpush1.msra.mxu0 0.0
    %113 = vmatprep.subr.mxu0 0.0
    %114 = vmatpush1.msra.mxu0 0.0
    %115 = vmatprep.subr.mxu0 0.0
    %116 = vmatpush1.msra.mxu0 0.0
    %117 = vmatprep.subr.mxu0 0.0
    %118 = vmatpush1.msra.mxu0 0.0
    %119 = vmatprep.subr.mxu0 0.0
    %120 = vmatpush1.msra.mxu0 0.0
    %121 = vmatprep.mubr.f32.mxu0 0.0
    %122 = vmatmul.mubr.f32.gmra.mrb[0].mxu0 %v55
    %v123 = vpop.f32.mrb[0].mxu0
    %v124 = vadd.f32 %v51, %v123
    %v125 = vpop.f32.mrb[0].mxu0
    %126 = vdwg.mxu0
    %vm127 = vcmask 130048
    %v128 = vsel %vm127, %v124, -inf
    %129 = vmax.xlane.f32.xlu0 %v128
    %v130 = vpop.xlane.xlu0 %129
    %v131 = vsub.f32 %v124, %v130
    %v132 = vmul.f32 %v131, 1.442695
    %v133 = vpow.pop %v132
    %v134 = vsel %vm127, %v133, 0.0
    %135 = vadd.xlane.f32.xlu0 %v134
    %v136 = vpop.xlane.xlu0 %135
    %v137 = vlog2.pop %v136
    %v138 = vmul.f32 %v137, 0.6931472
    %v139 = vadd.f32 %v130, %v138
    %v140 = vsub.f32 %v124, %v139
    %vm141 = vcmask 261248
    %v142 = vsel %vm141, %v124, -inf
    %143 = vmax.xlane.f32.xlu0 %v142
    %v144 = vpop.xlane.xlu0 %143
    %v145 = vsub.f32 %v124, %v144
    %v146 = vmul.f32 %v145, 1.442695
    %v147 = vpow.pop %v146
    %149 = vrot.lane.b32.xlu0 %v147, 112
    %v150 = vpop.permute.xlu0 %149
    %v152 = vsel %vm127, %v150, 0.0
    %153 = vadd.xlane.f32.xlu0 %v152
    %v154 = vpop.xlane.xlu0 %153
    %v155 = vlog2.pop %v154
    %v156 = vmul.f32 %v155, 0.6931472
    %v157 = vadd.f32 %v144, %v156
    %v158 = vsub.f32 %v124, %v157
    %vm159 = vcmask 392448
    %v160 = vsel %vm159, %v124, -inf
    %161 = vmax.xlane.f32.xlu0 %v160
    %v162 = vpop.xlane.xlu0 %161
    %v163 = vsub.f32 %v124, %v162
    %v164 = vmul.f32 %v163, 1.442695
    %v165 = vpow.pop %v164
    %167 = vrot.lane.b32.xlu0 %v165, 96
    %v168 = vpop.permute.xlu0 %167
    %v170 = vsel %vm127, %v168, 0.0
    %171 = vadd.xlane.f32.xlu0 %v170
    %v172 = vpop.xlane.xlu0 %171
    %v173 = vlog2.pop %v172
    %v174 = vmul.f32 %v173, 0.6931472
    %v175 = vadd.f32 %v162, %v174
    %v176 = vsub.f32 %v124, %v175
    %v177 = vsel %vm127, %v140, %v158
    %v178 = vsel %vm53, %v177, %v176
    %vm179 = vcmask 392192
    %v180 = vsel %vm179, %v178, 0.0
    %181 = vst [vmem:[#allocation7] sm:$0xff] %v180
    // Predicated region
    $region22: #{tpu_custom_call.1} parent=1 // pred_check
      _
    $region23: #{tpu_custom_call.1} parent=1 // pred_check_branch
      %183 = sbr.rel (0) target = $region25
    $region24: #{tpu_custom_call.1} parent=1 // pred_region
      %s185 = ssub.s32 128, 128
      %186 = vsyncadd [#allocation4], %s185
      %s188 = sshll.u32 [#allocation7], 4
      %s189 = int_to_ptr.vmem [resolvable:$true] %s188
      %191 = dma.vmem_to_hbm [thread:$0]  %s189, 128, %s3, [#allocation4]
    $region25: #{tpu_custom_call.1} parent=1 // pred_fallthru
      _
    // Predicated region
    $region26: #{tpu_custom_call.1} parent=1 // pred_check
      _
    $region27: #{tpu_custom_call.1} parent=1 // pred_check_branch
      %193 = sbr.rel (0) target = $region29
    $region28: #{tpu_custom_call.1} parent=1 // pred_region
      %194 = dma.done [#allocation4], 128
    $region29: #{tpu_custom_call.1} parent=1 // pred_fallthru
      _
    %195 = vsyncpa [#allocation3], 1
    %196 = vsyncpa [#allocation6], 1
    %197 = vsyncpa [#allocation4], 1

</llo_original>
